<compile_context>
chip_gen: v5e
topology: v5e:2x2
jax: 0.10.0
libtpu: 0.0.40
codegen_flags: <defaults>
</compile_context>

<pallas_src>
import math
import functools

import jax
import jax.numpy as jnp
from jax.experimental import pallas as pl
from jax.experimental.pallas import tpu as pltpu


# ------------------------------ helpers ------------------------------

def _row_tile(m, cap=512):
    """Largest divisor of m that is <= cap (row tile for the flattened [M, D] view)."""
    t = min(m, cap)
    while m % t:
        t -= 1
    return t


def _ln_f32(x, g, b, eps):
    """LayerNorm in f32 (inputs already cast)."""
    mu = jnp.mean(x, axis=-1, keepdims=True)
    xc = x - mu
    var = jnp.mean(xc * xc, axis=-1, keepdims=True)
    return xc * jax.lax.rsqrt(var + eps) * g + b


# ------------------------------ kernels ------------------------------

def _linear_kernel(x_ref, w_ref, b_ref, o_ref, *, activation):
    # bf16 operands, f32 MXU accumulator
    acc = jnp.dot(x_ref[...], w_ref[...], preferred_element_type=jnp.float32)
    acc = acc + b_ref[...].astype(jnp.float32)
    if activation == "relu":
        acc = jnp.maximum(acc, 0.0)
    o_ref[...] = acc.astype(o_ref.dtype)


def linear(x2d, w, b, activation=None):
    """y = x2d @ w + b (optional ReLU). x2d: [M, K] bf16, w: [K, N] bf16."""
    M, K = x2d.shape
    N = w.shape[1]
    bm = _row_tile(M)
    kern = functools.partial(_linear_kernel, activation=activation)
    return pl.pallas_call(
        kern,
        out_shape=jax.ShapeDtypeStruct((M, N), x2d.dtype),
        grid=(M // bm,),
        in_specs=[
            pl.BlockSpec((bm, K), lambda i: (i, 0)),
            pl.BlockSpec((K, N), lambda i: (0, 0)),   # weight resident (constant map)
            pl.BlockSpec((1, N), lambda i: (0, 0)),
        ],
        out_specs=pl.BlockSpec((bm, N), lambda i: (i, 0)),
        compiler_params=pltpu.CompilerParams(dimension_semantics=("parallel",)),
    )(x2d, w, b.reshape(1, N))


def _ln_linear_kernel(x_ref, g_ref, bln_ref, w_ref, b_ref, o_ref, *, eps, activation):
    x = x_ref[...].astype(jnp.float32)
    h = _ln_f32(x, g_ref[...].astype(jnp.float32), bln_ref[...].astype(jnp.float32), eps)
    acc = jnp.dot(h.astype(w_ref.dtype), w_ref[...], preferred_element_type=jnp.float32)
    acc = acc + b_ref[...].astype(jnp.float32)
    if activation == "relu":
        acc = jnp.maximum(acc, 0.0)
    o_ref[...] = acc.astype(o_ref.dtype)


def ln_linear(x2d, gamma, beta, w, b, activation=None, eps=1e-5):
    """Fused LayerNorm(x) @ w + b.  Used for the concatenated QKV projection."""
    M, D = x2d.shape
    N = w.shape[1]
    bm = _row_tile(M)
    kern = functools.partial(_ln_linear_kernel, eps=eps, activation=activation)
    return pl.pallas_call(
        kern,
        out_shape=jax.ShapeDtypeStruct((M, N), x2d.dtype),
        grid=(M // bm,),
        in_specs=[
            pl.BlockSpec((bm, D), lambda i: (i, 0)),
            pl.BlockSpec((1, D), lambda i: (0, 0)),
            pl.BlockSpec((1, D), lambda i: (0, 0)),
            pl.BlockSpec((D, N), lambda i: (0, 0)),
            pl.BlockSpec((1, N), lambda i: (0, 0)),
        ],
        out_specs=pl.BlockSpec((bm, N), lambda i: (i, 0)),
        compiler_params=pltpu.CompilerParams(dimension_semantics=("parallel",)),
    )(x2d, gamma.reshape(1, D), beta.reshape(1, D), w, b.reshape(1, N))


def _ln_ffn_kernel(x_ref, g_ref, bln_ref, w1_ref, b1_ref, w2_ref, b2_ref, o_ref, *, eps):
    x = x_ref[...].astype(jnp.float32)
    h = _ln_f32(x, g_ref[...].astype(jnp.float32), bln_ref[...].astype(jnp.float32), eps)
    h1 = jnp.dot(h.astype(w1_ref.dtype), w1_ref[...], preferred_element_type=jnp.float32)
    h1 = jnp.maximum(h1 + b1_ref[...].astype(jnp.float32), 0.0)
    h2 = jnp.dot(h1.astype(w2_ref.dtype), w2_ref[...], preferred_element_type=jnp.float32)
    h2 = h2 + b2_ref[...].astype(jnp.float32)
    o_ref[...] = (x + h2).astype(o_ref.dtype)        # residual in the epilogue


def ln_ffn_residual(x2d, gamma, beta, w1, b1, w2, b2, eps=1e-5):
    """x + W2(ReLU(W1(LayerNorm(x)) + b1)) + b2 in a single kernel."""
    M, D = x2d.shape
    Hd = w1.shape[1]
    bm = _row_tile(M)
    # TODO(synk): at production D (>=1024) on v7x, tile w1/w2 along N/K with a VMEM
    # f32 accumulator instead of keeping the full [D,4D] weights resident.
    kern = functools.partial(_ln_ffn_kernel, eps=eps)
    return pl.pallas_call(
        kern,
        out_shape=jax.ShapeDtypeStruct((M, D), x2d.dtype),
        grid=(M // bm,),
        in_specs=[
            pl.BlockSpec((bm, D), lambda i: (i, 0)),
            pl.BlockSpec((1, D), lambda i: (0, 0)),
            pl.BlockSpec((1, D), lambda i: (0, 0)),
            pl.BlockSpec((D, Hd), lambda i: (0, 0)),
            pl.BlockSpec((1, Hd), lambda i: (0, 0)),
            pl.BlockSpec((Hd, D), lambda i: (0, 0)),
            pl.BlockSpec((1, D), lambda i: (0, 0)),
        ],
        out_specs=pl.BlockSpec((bm, D), lambda i: (i, 0)),
        compiler_params=pltpu.CompilerParams(dimension_semantics=("parallel",)),
    )(x2d, gamma.reshape(1, D), beta.reshape(1, D),
      w1, b1.reshape(1, Hd), w2, b2.reshape(1, D))


def _layernorm_kernel(x_ref, g_ref, b_ref, o_ref, *, eps):
    x = x_ref[...].astype(jnp.float32)
    o_ref[...] = _ln_f32(x, g_ref[...].astype(jnp.float32),
                         b_ref[...].astype(jnp.float32), eps).astype(o_ref.dtype)


def layernorm(x2d, gamma, beta, eps=1e-5):
    M, D = x2d.shape
    bm = _row_tile(M)
    kern = functools.partial(_layernorm_kernel, eps=eps)
    return pl.pallas_call(
        kern,
        out_shape=jax.ShapeDtypeStruct((M, D), x2d.dtype),
        grid=(M // bm,),
        in_specs=[
            pl.BlockSpec((bm, D), lambda i: (i, 0)),
            pl.BlockSpec((1, D), lambda i: (0, 0)),
            pl.BlockSpec((1, D), lambda i: (0, 0)),
        ],
        out_specs=pl.BlockSpec((bm, D), lambda i: (i, 0)),
        compiler_params=pltpu.CompilerParams(dimension_semantics=("parallel",)),
    )(x2d, gamma.reshape(1, D), beta.reshape(1, D))


def _attn_kernel(qkv_ref, m_ref, wo_ref, bo_ref, res_ref, o_ref, *, H, Dh, scale):
    """One batch per grid step: all heads, softmax, out-projection and residual."""
    D = H * Dh
    S = qkv_ref.shape[1]
    qkv = qkv_ref[0].astype(jnp.float32)          # (S, 3D): [q | k | v]
    mask = m_ref[0]                               # (1, S), 0 = masked key
    # additive key-mask bias, hoisted out of the head loop
    bias = jnp.where(mask == 0, jnp.float32(-1e9), jnp.float32(0.0))   # (1, S)
    acc = jnp.zeros((S, D), jnp.float32)
    for h in range(H):                            # static unroll over heads
        q = qkv[:, h * Dh:(h + 1) * Dh] * scale   # fold 1/sqrt(Dh) into q (SxDh)
        k = qkv[:, D + h * Dh:D + (h + 1) * Dh]
        v = qkv[:, 2 * D + h * Dh:2 * D + (h + 1) * Dh]
        s = jnp.dot(q, k.T, preferred_element_type=jnp.float32) + bias   # (S, S)
        s = s - jnp.max(s, axis=-1, keepdims=True)
        p = jnp.exp(s)
        p = p * pl.reciprocal(jnp.sum(p, axis=-1, keepdims=True), approx=True)
        ctx_h = jnp.dot(p, v, preferred_element_type=jnp.float32)        # (S, Dh)
        # per-head context feeds straight into its slice of the out-projection
        # (avoids an in-kernel concat + extra copies)
        acc = acc + jnp.dot(ctx_h.astype(wo_ref.dtype),
                            wo_ref[h * Dh:(h + 1) * Dh, :],
                            preferred_element_type=jnp.float32)
    proj = acc + bo_ref[...].astype(jnp.float32)
    o_ref[0] = (res_ref[0].astype(jnp.float32) + proj).astype(o_ref.dtype)


def attention_block(qkv, mask, wo, bo, resid, *, head_num):
    """qkv: [B, S, 3D] (from fused LN+QKV), mask: [B, 1, S], resid: [B, S, D]."""
    B, S, threeD = qkv.shape
    D = threeD // 3
    Dh = D // head_num
    # TODO(synk): for long sequences convert to a flash-style online-softmax loop
    # over KV tiles so VMEM stays O(S*Dh) (needed on v7x's 64 MiB VMEM).
    kern = functools.partial(_attn_kernel, H=head_num, Dh=Dh,
                             scale=1.0 / math.sqrt(Dh))
    return pl.pallas_call(
        kern,
        out_shape=jax.ShapeDtypeStruct((B, S, D), resid.dtype),
        grid=(B,),
        in_specs=[
            pl.BlockSpec((1, S, threeD), lambda b: (b, 0, 0)),
            pl.BlockSpec((1, 1, S), lambda b: (b, 0, 0)),
            pl.BlockSpec((D, D), lambda b: (0, 0)),
            pl.BlockSpec((1, D), lambda b: (0, 0)),
            pl.BlockSpec((1, S, D), lambda b: (b, 0, 0)),
        ],
        out_specs=pl.BlockSpec((1, S, D), lambda b: (b, 0, 0)),
        compiler_params=pltpu.CompilerParams(dimension_semantics=("parallel",)),
    )(qkv, mask, wo, bo.reshape(1, D), resid)


# --------------------------- model glue / params ---------------------------

def sinusoidal_pe(seq_len, dim):
    pos = jnp.arange(seq_len, dtype=jnp.float32)[:, None]
    div = jnp.exp(jnp.arange(0, dim, 2, dtype=jnp.float32)
                  * (-(math.log(10000.0) / dim)))
    pe = jnp.zeros((seq_len, dim), jnp.float32)
    pe = pe.at[:, 0::2].set(jnp.sin(pos * div))
    pe = pe.at[:, 1::2].set(jnp.cos(pos * div))
    return pe


def init_params(key, vocab_size, dim, emb_dim, depth, dtype=jnp.bfloat16):
    hidden = 4 * dim
    keys = jax.random.split(key, 2 + depth)

    def dense(k, fan_in, fan_out):
        w = (0.02 * jax.random.normal(k, (fan_in, fan_out), jnp.float32)).astype(dtype)
        return w, jnp.zeros((fan_out,), dtype)

    params = {
        "token_emb": (0.02 * jax.random.normal(keys[0], (vocab_size, emb_dim),
                                               jnp.float32)).astype(dtype),
        "lnf_g": jnp.ones((dim,), dtype),
        "lnf_b": jnp.zeros((dim,), dtype),
        "layers": [],
    }
    if emb_dim != dim:
        pw, pb = dense(keys[1], emb_dim, dim)
        params["proj_w"], params["proj_b"] = pw, pb

    for d in range(depth):
        lk = jax.random.split(keys[2 + d], 4)
        wqkv, bqkv = dense(lk[0], dim, 3 * dim)     # fused q|k|v projection
        wo, bo = dense(lk[1], dim, dim)
        w1, b1 = dense(lk[2], dim, hidden)
        w2, b2 = dense(lk[3], hidden, dim)
        params["layers"].append({
            "wqkv": wqkv, "bqkv": bqkv, "wo": wo, "bo": bo,
            "w1": w1, "b1": b1, "w2": w2, "b2": b2,
            "ln1_g": jnp.ones((dim,), dtype), "ln1_b": jnp.zeros((dim,), dtype),
            "ln2_g": jnp.ones((dim,), dtype), "ln2_b": jnp.zeros((dim,), dtype),
        })
    return params


def transformer_encoder_forward(params, input_ids, input_mask, dim, emb_dim, head_num):
    B, S = input_ids.shape
    M = B * S

    # token embedding gather + sinusoidal positional embedding (plain-JAX glue)
    # TODO(synk): the gather itself has no clean dense-BlockSpec form; it stays in XLA.
    x = params["token_emb"][input_ids].astype(jnp.float32)        # [B, S, emb]
    x = (x + sinusoidal_pe(S, emb_dim)[None, :, :]).astype(jnp.bfloat16)

    if emb_dim != dim:
        x = linear(x.reshape(M, emb_dim),
                   params["proj_w"], params["proj_b"]).reshape(B, S, dim)

    # TODO(synk): dropout layers are inference-mode identities here (no RNG dropout).
    for layer in params["layers"]:
        # 1) fused pre-norm + concatenated QKV projection
        qkv = ln_linear(x.reshape(M, dim), layer["ln1_g"], layer["ln1_b"],
                        layer["wqkv"], layer["bqkv"]).reshape(B, S, 3 * dim)
        # 2) fused multi-head attention + out-projection + residual
        x = attention_block(qkv, input_mask, layer["wo"], layer["bo"], x,
                            head_num=head_num)
        # 3) fused pre-norm + FFN + residual
        x = ln_ffn_residual(x.reshape(M, dim), layer["ln2_g"], layer["ln2_b"],
                            layer["w1"], layer["b1"], layer["w2"],
                            layer["b2"]).reshape(B, S, dim)

    # final LayerNorm
    return layernorm(x.reshape(M, dim), params["lnf_g"],
                     params["lnf_b"]).reshape(B, S, dim)


# ------------------------------------ main ------------------------------------

if __name__ == "__main__":
    VOCAB = 100
    DIM = 32          # model dim
    EMB_DIM = 16      # != DIM -> exercises embeddings_project
    DEPTH = 2
    HEADS = 4
    B, S = 2, 8

    key = jax.random.PRNGKey(0)
    k_param, k_ids = jax.random.split(key)

    params = init_params(k_param, VOCAB, DIM, EMB_DIM, DEPTH)

    input_ids = jax.random.randint(k_ids, (B, S), 0, VOCAB, dtype=jnp.int32)
    # mask: 1 = attend, 0 = masked; last two keys of batch 1 are padding
    input_mask = jnp.ones((B, 1, S), jnp.int32)
    input_mask = input_mask.at[1, 0, S - 2:].set(0)

    out = transformer_encoder_forward(params, input_ids, input_mask,
                                      DIM, EMB_DIM, HEADS)
    out = jax.block_until_ready(out)
    assert out.shape == (B, S, DIM)
    assert jnp.all(jnp.isfinite(out.astype(jnp.float32)))
    print("KERNEL_OK")
</pallas_src>

<mosaic_0001>
module attributes {stable_mosaic.version = 11 : i64} {
  func.func @_linear_kernel(%arg0: i32, %arg1: memref<16x16xbf16, #tpu.memory_space<vmem>>, %arg2: memref<16x32xbf16, #tpu.memory_space<vmem>>, %arg3: memref<1x32xbf16, #tpu.memory_space<vmem>>, %arg4: memref<16x32xbf16, #tpu.memory_space<vmem>>) attributes {dimension_semantics = [#tpu.dimension_semantics<parallel>], iteration_bounds = array<i64: 1>, scalar_prefetch = 0 : i64, scratch_operands = 0 : i64, tpu.core_type = #tpu.core_type<tc>, window_params = [{transform_indices = @transform_0, window_bounds = array<i64: 16, 16>}, {pipeline_mode = #tpu.pipeline_mode<synchronous>, transform_indices = @transform_1, window_bounds = array<i64: 16, 32>}, {pipeline_mode = #tpu.pipeline_mode<synchronous>, transform_indices = @transform_2, window_bounds = array<i64: 1, 32>}, {transform_indices = @transform_3, window_bounds = array<i64: 16, 32>}]} {
    %c0 = arith.constant 0 : index
    %c0_0 = arith.constant 0 : index
    %0 = vector.load %arg1[%c0, %c0_0] : memref<16x16xbf16, #tpu.memory_space<vmem>>, vector<16x16xbf16>
    %c0_1 = arith.constant 0 : index
    %c0_2 = arith.constant 0 : index
    %1 = vector.load %arg2[%c0_1, %c0_2] : memref<16x32xbf16, #tpu.memory_space<vmem>>, vector<16x32xbf16>
    %cst = arith.constant dense<0.000000e+00> : vector<16x32xf32>
    %2 = tpu.matmul %0, %1, %cst {dimension_numbers = #tpu.dot_dimension_numbers<[1], [0], [0], [1], [0, 0, 1, 1], [], []>} : vector<16x16xbf16>, vector<16x32xbf16>, vector<16x32xf32> -> vector<16x32xf32>
    %c0_3 = arith.constant 0 : index
    %c0_4 = arith.constant 0 : index
    %3 = vector.load %arg3[%c0_3, %c0_4] : memref<1x32xbf16, #tpu.memory_space<vmem>>, vector<1x32xbf16>
    %4 = arith.extf %3 : vector<1x32xbf16> to vector<1x32xf32>
    %5 = vector.broadcast %4 : vector<1x32xf32> to vector<16x32xf32>
    %6 = arith.addf %2, %5 : vector<16x32xf32>
    %7 = arith.truncf %6 : vector<16x32xf32> to vector<16x32xbf16>
    %c0_5 = arith.constant 0 : index
    %c0_6 = arith.constant 0 : index
    %8 = vector.load %arg4[%c0_5, %c0_6] : memref<16x32xbf16, #tpu.memory_space<vmem>>, vector<16x32xbf16>
    tpu.vector_store %arg4[%c0_5, %c0_6], %7 {strides = array<i32>} : memref<16x32xbf16, #tpu.memory_space<vmem>>, vector<16x32xbf16>,
    return
  }
  func.func @transform_0(%arg0: i32) -> (i32, i32) {
    %c0_i32 = arith.constant 0 : i32
    %c0_i32_0 = arith.constant 0 : i32
    return %arg0, %c0_i32 : i32, i32
  }
  func.func @transform_1(%arg0: i32) -> (i32, i32) {
    %c0_i32 = arith.constant 0 : i32
    %c0_i32_0 = arith.constant 0 : i32
    %c0_i32_1 = arith.constant 0 : i32
    return %c0_i32, %c0_i32_0 : i32, i32
  }
  func.func @transform_2(%arg0: i32) -> (i32, i32) {
    %c0_i32 = arith.constant 0 : i32
    %c0_i32_0 = arith.constant 0 : i32
    %c0_i32_1 = arith.constant 0 : i32
    return %c0_i32, %c0_i32_0 : i32, i32
  }
  func.func @transform_3(%arg0: i32) -> (i32, i32) {
    %c0_i32 = arith.constant 0 : i32
    %c0_i32_0 = arith.constant 0 : i32
    return %arg0, %c0_i32 : i32, i32
  }
}

</mosaic_0001>

<llo_original>
// kernel: tpu_custom_call.1
$region0: #{tpu_custom_call.1}
  #allocation0 [shape = 'u32[]', space=smem, size = 0x4, offset = 0x4, fixed_abs, tag = 'smem constant byte address 0x4 - core index']
  #allocation1 [shape = 'u32[72,128]{1,0:T(1,128)}', space=vmem, size = 0x9000, scoped, tag = 'internal scratch']
  %s0 = inlined_call_operand.hbm [shape: bf16[16,16], index: 0, kind: input, shape index: {}]
  %s1 = inlined_call_operand.hbm [shape: bf16[16,32], index: 1, kind: input, shape index: {}]
  %s2 = inlined_call_operand.vmem [shape: bf16[1,32], index: 2, kind: input, shape index: {}]
  %s3 = inlined_call_operand.hbm [shape: bf16[16,32], index: 3, kind: output, shape index: {}]
  %s4 = sld [smem:[#allocation0]]
  $region30: #{tpu_custom_call.1} parent=0
    _
  %s6 = ssub.s32 1, %s4
  %s7 = scalar_select 0, %s6, %s4
  $region1: #{tpu_custom_call.1} parent=0
    #allocation2 [shape = 'u8[4096]{0}', space=vmem, size = 0x1000, scoped, tag = 'input window, operand 0, single buffered']
    #allocation3 [shape = 's32[1]{0}', space=sflag, size = 0x4, scoped, tag = 'scoped memory for tpu_custom_call.1']
    #allocation4 [shape = 's32[1]{0}', space=sflag, size = 0x4, scoped, tag = 'scoped memory for tpu_custom_call.1']
    #allocation5 [shape = 'u8[4096]{0}', space=vmem, size = 0x1000, scoped, tag = 'input window, operand 1, single buffered']
    #allocation6 [shape = 's32[1]{0}', space=sflag, size = 0x4, scoped, tag = 'scoped memory for tpu_custom_call.1']
    #allocation7 [shape = 'u8[4096]{0}', space=vmem, size = 0x1000, scoped, tag = 'output window, operand 0, single buffered']
    %8 = vsyncpa [#allocation3], 0
    %9 = vsyncpa [#allocation6], 0
    %10 = vsyncpa [#allocation4], 0
    // Predicated region
    $region2: #{tpu_custom_call.1} parent=1 // pred_check
      _
    $region3: #{tpu_custom_call.1} parent=1 // pred_check_branch
      %12 = sbr.rel (0) target = $region5
    $region4: #{tpu_custom_call.1} parent=1 // pred_region
      %14 = vsyncadd [#allocation3], 0
      %s15 = sshll.u32 %s0, 4
      %s16 = int_to_ptr.hbm [resolvable:$true] %s15
      %s17 = sshll.u32 [#allocation2], 4
      %s18 = int_to_ptr.vmem [resolvable:$true] %s17
      %23 = dma.hbm_to_vmem [thread:$0]  %s16, 128, %s18, [#allocation3], 64, 64, 4
    $region5: #{tpu_custom_call.1} parent=1 // pred_fallthru
      _
    // Predicated region
    $region6: #{tpu_custom_call.1} parent=1 // pred_check
      _
    $region7: #{tpu_custom_call.1} parent=1 // pred_check_branch
      %25 = sbr.rel (0) target = $region9
    $region8: #{tpu_custom_call.1} parent=1 // pred_region
      %27 = vsyncadd [#allocation6], 0
      %s28 = sshll.u32 %s1, 4
      %s29 = int_to_ptr.hbm [resolvable:$true] %s28
      %s30 = sshll.u32 [#allocation5], 4
      %s31 = int_to_ptr.vmem [resolvable:$true] %s30
      %36 = dma.hbm_to_vmem [thread:$0]  %s29, 128, %s31, [#allocation6], 64, 64, 4
    $region9: #{tpu_custom_call.1} parent=1 // pred_fallthru
      _
    // Predicated region
    $region10: #{tpu_custom_call.1} parent=1 // pred_check
      _
    $region11: #{tpu_custom_call.1} parent=1 // pred_check_branch
      %38 = sbr.rel (0) target = $region13
    $region12: #{tpu_custom_call.1} parent=1 // pred_region
      _
    $region13: #{tpu_custom_call.1} parent=1 // pred_fallthru
      _
    // Predicated region
    $region14: #{tpu_custom_call.1} parent=1 // pred_check
      _
    $region15: #{tpu_custom_call.1} parent=1 // pred_check_branch
      %40 = sbr.rel (0) target = $region17
    $region16: #{tpu_custom_call.1} parent=1 // pred_region
      %42 = dma.done [#allocation3], 128
    $region17: #{tpu_custom_call.1} parent=1 // pred_fallthru
      _
    // Predicated region
    $region18: #{tpu_custom_call.1} parent=1 // pred_check
      _
    $region19: #{tpu_custom_call.1} parent=1 // pred_check_branch
      %44 = sbr.rel (0) target = $region21
    $region20: #{tpu_custom_call.1} parent=1 // pred_region
      %46 = dma.done [#allocation6], 128
    $region21: #{tpu_custom_call.1} parent=1 // pred_fallthru
      _
    %v48 = vld [vmem:[#allocation2] sm:$0xf]
    %v49 = vld [vmem:[#allocation2 + $0x4] sm:$0xf]
    %v50 = vld [vmem:[#allocation5] sm:$0xf]
    %v51 = vld [vmem:[#allocation5 + $0x4] sm:$0xf]
    %v52 = vld [vmem:[%s2] sm:$0x1]
    %v53 = vunpack.c.l.bf16 %v52
    %v54 = vperm.slane %v53, 0
    %v57 = vunpack.c.l.b16 %v48
    %v58 = vunpack.c.l.b16 %v49
    %v59 = vpack.c.b16 %v58, %v57
    %v62 = vunpack.c.l.b16 %v50
    %v63 = vunpack.c.l.b16 %v51
    %v64 = vpack.c.b16 %v63, %v62
    %vm66 = vcmask 130048
    %v68 = vsel %vm66, %v59, 0
    %70 = vmatpush.bf16.msra.mxu0 0
    %71 = vmatpush.bf16.msra.mxu0 0
    %72 = vmatpush.bf16.msra.mxu0 0
    %73 = vmatpush.bf16.msra.mxu0 0
    %74 = vmatpush.bf16.msra.mxu0 0
    %75 = vmatpush.bf16.msra.mxu0 0
    %76 = vmatpush.bf16.msra.mxu0 0
    %77 = vmatpush.bf16.msra.mxu0 %v64
    %78 = vmatmul.bf16.gmra.mxu0 %v68
    %v79 = vpop.f32.mrf.mxu0
    %v80 = vadd.f32 %v54, %v79
    %v81 = vpop.f32.mrf.mxu0
    %v82 = vadd.f32 %v54, %v81
    %83 = vdwg.mxu0
    %v84 = vpack.c.bf16 %v80, %v80
    %v85 = vpack.c.bf16 %v82, %v82
    %vm86 = vcmask 257024
    %87 = vst.msk [vmem:[#allocation7] sm:$0xf] %vm86, %v84
    %88 = vst.msk [vmem:[#allocation7 + $0x4] sm:$0xf] %vm86, %v85
    // Predicated region
    $region22: #{tpu_custom_call.1} parent=1 // pred_check
      _
    $region23: #{tpu_custom_call.1} parent=1 // pred_check_branch
      %90 = sbr.rel (0) target = $region25
    $region24: #{tpu_custom_call.1} parent=1 // pred_region
      %92 = vsyncadd [#allocation4], 0
      %s93 = sshll.u32 [#allocation7], 4
      %s94 = int_to_ptr.vmem [resolvable:$true] %s93
      %s95 = sshll.u32 %s3, 4
      %s96 = int_to_ptr.hbm [resolvable:$true] %s95
      %101 = dma.vmem_to_hbm [thread:$0]  %s94, 128, %s96, [#allocation4], 64, 64, 4
    $region25: #{tpu_custom_call.1} parent=1 // pred_fallthru
      _
    // Predicated region
    $region26: #{tpu_custom_call.1} parent=1 // pred_check
      _
    $region27: #{tpu_custom_call.1} parent=1 // pred_check_branch
      %103 = sbr.rel (0) target = $region29
    $region28: #{tpu_custom_call.1} parent=1 // pred_region
      %105 = dma.done [#allocation4], 128
    $region29: #{tpu_custom_call.1} parent=1 // pred_fallthru
      _
    %106 = vsyncpa [#allocation3], 1
    %107 = vsyncpa [#allocation6], 1
    %108 = vsyncpa [#allocation4], 1

</llo_original>
